<compile_context>
chip_gen: v5e
topology: v5e:2x2
jax: 0.10.0
libtpu: 0.0.40
codegen_flags: <defaults>
</compile_context>

<pallas_src>
import functools
import math

import jax
import jax.numpy as jnp
from jax.experimental import pallas as pl
from jax.experimental.pallas import tpu as pltpu

_LANE = 128
_SUBLANE = 8
_MAX_BLOCK_ROWS = 4096  # 4096 * 128 * 4B = 2 MiB per f32 block


def _round_up(a, b):
    return (a + b - 1) // b * b


@functools.lru_cache(maxsize=1)
def _tensorcores_per_chip():
    """TensorCores addressable by one Pallas call (v7x megacore = 2, v5e/v6e = 1)."""
    try:
        kind = jax.devices()[0].device_kind.lower()
    except Exception:
        return 1
    return 2 if "v7" in kind else 1


# ----------------------------- kernels --------------------------------------


def _spiking_kernel(x_ref, o_ref):
    x = x_ref[...]
    o_ref[...] = (x >= 0).astype(o_ref.dtype)


def _primitive_kernel(alpha_ref, x_ref, o_ref):
    alpha = alpha_ref[0, 0]                      # f32 scalar from SMEM
    x = x_ref[...].astype(jnp.float32)           # compute in f32 regardless of input dtype
    half_pi_alpha = jnp.float32(math.pi / 2.0) * alpha
    y = jnp.arctan(half_pi_alpha * x) * jnp.float32(1.0 / math.pi) + jnp.float32(0.5)
    o_ref[...] = y.astype(o_ref.dtype)


# ----------------------------- fused jnp fallback -----------------------------


def _elementwise_ref(x, alpha, spiking):
    """XLA-fused elementwise path for ragged (non-lane-aligned) element counts."""
    if spiking:
        return (x >= 0).astype(x.dtype)
    xf = x.astype(jnp.float32)
    y = jnp.arctan(jnp.float32(math.pi / 2.0) * alpha * xf) * jnp.float32(1.0 / math.pi)
    return (y + jnp.float32(0.5)).astype(x.dtype)


# ----------------------------- forward wrapper --------------------------------


@functools.partial(jax.jit, static_argnames=("spiking",))
def _forward_impl(x, alpha, *, spiking):
    orig_shape = x.shape
    orig_dtype = x.dtype

    # TPU vector path has no f64; compute in f32 and cast back at the boundary.
    if jnp.dtype(orig_dtype).itemsize > 4:
        x = x.astype(jnp.float32)
    work_dtype = x.dtype

    n = x.size
    if n == 0 or n % _LANE != 0:
        # Ragged element count: a pad + slice around the pallas_call would roughly
        # triple HBM traffic, so use the fused jnp expression instead.
        return _elementwise_ref(x, alpha, spiking).astype(orig_dtype).reshape(orig_shape)

    rows = n // _LANE
    x2d = x.reshape(rows, _LANE)

    # Sublane packing factor (f32 -> 8 rows/tile, bf16 -> 16, int8/fp8 -> 32).
    packing = max(1, 4 // jnp.dtype(work_dtype).itemsize)
    sub = _SUBLANE * packing

    ncores = _tensorcores_per_chip()
    if ncores > 1 and rows >= 2 * ncores * sub:
        # v7x megacore: even grid with >= 2 blocks per TensorCore so each core keeps
        # its own double-buffer overlap and the load is balanced.
        block_rows = min(_MAX_BLOCK_ROWS, _round_up(pl.cdiv(rows, 2 * ncores), sub))
        steps = pl.cdiv(rows, block_rows)
        if steps > 2 and steps % 2 == 1:
            block_rows = min(_MAX_BLOCK_ROWS, _round_up(pl.cdiv(rows, steps - 1), sub))
    elif rows <= _MAX_BLOCK_ROWS:
        # Single-TC chips (v5e/v6e): one full-array block, zero extra grid-step overhead.
        # A full-array block is legal for any row count (no (8,128) divisibility needed).
        block_rows = rows
    else:
        block_rows = _MAX_BLOCK_ROWS  # multiple of sub; partial tail block is masked.

    grid = (pl.cdiv(rows, block_rows),)
    data_spec = pl.BlockSpec((block_rows, _LANE), lambda i: (i, 0))
    compiler_params = pltpu.CompilerParams(dimension_semantics=("parallel",))
    out_shape = jax.ShapeDtypeStruct((rows, _LANE), work_dtype)

    if spiking:
        out2d = pl.pallas_call(
            _spiking_kernel,
            out_shape=out_shape,
            grid=grid,
            in_specs=[data_spec],
            out_specs=data_spec,
            compiler_params=compiler_params,
        )(x2d)
    else:
        alpha_arr = jnp.asarray(alpha, jnp.float32).reshape(1, 1)
        out2d = pl.pallas_call(
            _primitive_kernel,
            out_shape=out_shape,
            grid=grid,
            in_specs=[
                pl.BlockSpec(memory_space=pltpu.MemorySpace.SMEM),  # alpha scalar
                data_spec,
            ],
            out_specs=data_spec,
            compiler_params=compiler_params,
        )(alpha_arr, x2d)

    return out2d.astype(orig_dtype).reshape(orig_shape)


# ----------------------------- custom VJP (surrogate gradient) ----------------


@functools.partial(jax.custom_vjp, nondiff_argnums=(2,))
def _atan_surrogate(x, alpha, spiking):
    return _forward_impl(x, alpha, spiking=spiking)


def _atan_surrogate_fwd(x, alpha, spiking):
    return _forward_impl(x, alpha, spiking=spiking), (x, alpha)


def _atan_surrogate_bwd(spiking, res, g):
    # ATan surrogate gradient (also the exact gradient of the primitive):
    #   d/dx  = alpha/2 / (1 + (pi/2*alpha*x)^2)
    #   d/da  = x/2     / (1 + (pi/2*alpha*x)^2)
    x, alpha = res
    xf = x.astype(jnp.float32)
    gf = g.astype(jnp.float32)
    af = alpha.astype(jnp.float32)
    shared = gf / (1.0 + (jnp.float32(math.pi / 2.0) * af * xf) ** 2)
    grad_x = ((af * 0.5) * shared).astype(x.dtype)
    grad_alpha = jnp.sum(0.5 * xf * shared).astype(alpha.dtype).reshape(alpha.shape)
    return grad_x, grad_alpha


_atan_surrogate.defvjp(_atan_surrogate_fwd, _atan_surrogate_bwd)


# ----------------------------- module-like wrapper -----------------------------


class ATanSurrogate:
    """JAX/Pallas port of SurrogateFunctionBase (ATan surrogate)."""

    def __init__(self, alpha=2.0, spiking=True):
        self.alpha = float(alpha)
        self.spiking = spiking

    def set_spiking_mode(self, spiking: bool):
        self.spiking = spiking

    def extra_repr(self):
        return f"alpha={self.alpha}, spiking={self.spiking}"

    @staticmethod
    def spiking_function(x, alpha):
        return _atan_surrogate(x, jnp.asarray(alpha, jnp.float32), True)

    @staticmethod
    def primitive_function(x, alpha):
        return _atan_surrogate(x, jnp.asarray(alpha, jnp.float32), False)

    def __call__(self, x):
        return _atan_surrogate(x, jnp.asarray(self.alpha, jnp.float32), self.spiking)


if __name__ == "__main__":
    key = jax.random.PRNGKey(0)
    # NCHW input, small shape (2048 elements -> 16 lane-dense rows, single block)
    x = jax.random.normal(key, (2, 4, 16, 16), dtype=jnp.float32)

    surrogate = ATanSurrogate(alpha=2.0, spiking=True)

    # spiking path (heaviside forward)
    y_spike = jax.block_until_ready(surrogate(x))
    ref_spike = (x >= 0).astype(x.dtype)
    assert y_spike.shape == x.shape and y_spike.dtype == x.dtype
    assert jnp.array_equal(y_spike, ref_spike)

    # non-spiking path (ATan primitive), two alphas hit the same compiled kernel
    surrogate.set_spiking_mode(False)
    y_prim = jax.block_until_ready(surrogate(x))
    ref_prim = jnp.arctan(math.pi / 2.0 * 2.0 * x) / math.pi + 0.5
    assert jnp.allclose(y_prim, ref_prim, atol=1e-6)

    y_prim_a3 = jax.block_until_ready(ATanSurrogate.primitive_function(x, 3.0))
    ref_prim_a3 = jnp.arctan(math.pi / 2.0 * 3.0 * x) / math.pi + 0.5
    assert jnp.allclose(y_prim_a3, ref_prim_a3, atol=1e-6)

    # lane-aligned but not (8,128)-tile-aligned: runs the Pallas path as one (3,128) block
    x_3rows = jax.random.normal(jax.random.PRNGKey(1), (3, 128), dtype=jnp.float32)
    y_3rows = jax.block_until_ready(ATanSurrogate.spiking_function(x_3rows, 2.0))
    assert jnp.array_equal(y_3rows, (x_3rows >= 0).astype(x_3rows.dtype))

    # ragged element count: fused jnp fallback (no pad/slice HBM traffic)
    x_ragged = jax.random.normal(jax.random.PRNGKey(2), (3, 5, 7), dtype=jnp.float32)
    y_ragged = jax.block_until_ready(ATanSurrogate.spiking_function(x_ragged, 2.0))
    assert y_ragged.shape == x_ragged.shape
    assert jnp.array_equal(y_ragged, (x_ragged >= 0).astype(x_ragged.dtype))

    # bf16 input: kernel computes the primitive in f32, stores bf16
    x_bf16 = x.astype(jnp.bfloat16)
    y_bf16 = jax.block_until_ready(ATanSurrogate.primitive_function(x_bf16, 2.0))
    ref_bf16 = (
        jnp.arctan(math.pi / 2.0 * 2.0 * x_bf16.astype(jnp.float32)) / math.pi + 0.5
    ).astype(jnp.bfloat16)
    assert y_bf16.dtype == jnp.bfloat16
    assert jnp.allclose(
        y_bf16.astype(jnp.float32), ref_bf16.astype(jnp.float32), atol=1e-2
    )

    # training path: ATan surrogate gradient via jax.custom_vjp
    def loss(xx):
        return jnp.sum(ATanSurrogate.spiking_function(xx, 2.0))

    g = jax.block_until_ready(jax.grad(loss)(x))
    ref_g = (2.0 / 2.0) / (1.0 + (math.pi / 2.0 * 2.0 * x) ** 2)
    assert jnp.allclose(g, ref_g, atol=1e-6)

    print("KERNEL_OK")
</pallas_src>

<mosaic_0001>
module attributes {stable_mosaic.version = 11 : i64} {
  func.func @_spiking_kernel(%arg0: i32, %arg1: memref<16x128xf32, #tpu.memory_space<vmem>>, %arg2: memref<16x128xf32, #tpu.memory_space<vmem>>) attributes {dimension_semantics = [#tpu.dimension_semantics<parallel>], iteration_bounds = array<i64: 1>, scalar_prefetch = 0 : i64, scratch_operands = 0 : i64, tpu.core_type = #tpu.core_type<tc>, window_params = [{transform_indices = @transform_0, window_bounds = array<i64: 16, 128>}, {transform_indices = @transform_1, window_bounds = array<i64: 16, 128>}]} {
    %c0 = arith.constant 0 : index
    %c0_0 = arith.constant 0 : index
    %0 = vector.load %arg1[%c0, %c0_0] : memref<16x128xf32, #tpu.memory_space<vmem>>, vector<16x128xf32>
    %cst = arith.constant 0.000000e+00 : f32
    %1 = vector.broadcast %cst : f32 to vector<16x128xf32>
    %2 = arith.cmpf oge, %0, %1 : vector<16x128xf32>
    %3 = arith.extui %2 : vector<16x128xi1> to vector<16x128xi32>
    %4 = arith.sitofp %3 : vector<16x128xi32> to vector<16x128xf32>
    %c0_1 = arith.constant 0 : index
    %c0_2 = arith.constant 0 : index
    %5 = vector.load %arg2[%c0_1, %c0_2] : memref<16x128xf32, #tpu.memory_space<vmem>>, vector<16x128xf32>
    tpu.vector_store %arg2[%c0_1, %c0_2], %4 {strides = array<i32>} : memref<16x128xf32, #tpu.memory_space<vmem>>, vector<16x128xf32>,
    return
  }
  func.func @transform_0(%arg0: i32) -> (i32, i32) {
    %c0_i32 = arith.constant 0 : i32
    %c0_i32_0 = arith.constant 0 : i32
    return %arg0, %c0_i32 : i32, i32
  }
  func.func @transform_1(%arg0: i32) -> (i32, i32) {
    %c0_i32 = arith.constant 0 : i32
    %c0_i32_0 = arith.constant 0 : i32
    return %arg0, %c0_i32 : i32, i32
  }
}

</mosaic_0001>

<llo_original>
// kernel: _forward_impl.1
$region0: #{_forward_impl.1}
  #allocation0 [shape = 'u32[]', space=smem, size = 0x4, offset = 0x4, fixed_abs, tag = 'smem constant byte address 0x4 - core index']
  #allocation1 [shape = 'u32[72,128]{1,0:T(1,128)}', space=vmem, size = 0x9000, scoped, tag = 'internal scratch']
  %s0 = inlined_call_operand.vmem [shape: f32[16,128], index: 0, kind: input, shape index: {}]
  %s1 = inlined_call_operand.vmem [shape: f32[16,128], index: 1, kind: output, shape index: {}]
  %s2 = sld [smem:[#allocation0]]
  $region14: #{_forward_impl.1} parent=0
    _
  %s4 = ssub.s32 1, %s2
  %s5 = scalar_select 0, %s4, %s2
  // Predicated region
  $region2: #{_forward_impl.1} parent=0 // pred_check
    _
  $region3: #{_forward_impl.1} parent=0 // pred_check_branch
    %7 = sbr.rel (0) target = $region5
  $region4: #{_forward_impl.1} parent=0 // pred_region
    _
  $region5: #{_forward_impl.1} parent=0 // pred_fallthru
    _
  %v8 = vld [vmem:[%s0] sm:$0xff]
  %v9 = vld [vmem:[%s0 + $0x8] sm:$0xff]
  %vm10 = vcmp.ge.f32.partialorder %v8, 0.0
  %vm11 = vcmp.ge.f32.partialorder %v9, 0.0
  %v12 = vsel %vm10, 1, 0
  %v13 = vsel %vm11, 1, 0
  %v14 = vcvt.s32.f32 %v12
  %v15 = vcvt.s32.f32 %v13
  %16 = vst [vmem:[%s1] sm:$0xff] %v14
  %17 = vst [vmem:[%s1 + $0x8] sm:$0xff] %v15
  // Predicated region
  $region6: #{_forward_impl.1} parent=0 // pred_check
    _
  $region7: #{_forward_impl.1} parent=0 // pred_check_branch
    %19 = sbr.rel (0) target = $region9
  $region8: #{_forward_impl.1} parent=0 // pred_region
    _
  $region9: #{_forward_impl.1} parent=0 // pred_fallthru
    _
  // Predicated region
  $region10: #{_forward_impl.1} parent=0 // pred_check
    _
  $region11: #{_forward_impl.1} parent=0 // pred_check_branch
    %21 = sbr.rel (0) target = $region13
  $region12: #{_forward_impl.1} parent=0 // pred_region
    _
  $region13: #{_forward_impl.1} parent=0 // pred_fallthru
    _

</llo_original>
